<compile_context>
chip_gen: v7x
topology: tpu7x:2x2x1
jax: 0.10.0
libtpu: 0.0.40
codegen_flags: <defaults>
</compile_context>

<pallas_src>
import numpy as np
import jax
import jax.numpy as jnp
from jax.experimental import pallas as pl
from jax.experimental.pallas import tpu as pltpu

# ---- module hyper-parameters (from __init__ defaults) ----------------------
GAUSSIAN_SIGMAS = (0.5, 1.0, 2.0, 4.0, 8.0)
DATA_RANGE = 1.0
K = (0.01, 0.03)
ALPHA = 0.84
COMPENSATION = 200.0
NUM_CLASSES = 7
NUM_SIGMAS = len(GAUSSIAN_SIGMAS)
FILTER_SIZE = int(4 * GAUSSIAN_SIGMAS[-1] + 1)   # 33
PAD = int(2 * GAUSSIAN_SIGMAS[-1])               # 16
C1 = (K[0] * DATA_RANGE) ** 2
C2 = (K[1] * DATA_RANGE) ** 2
OUT_CHANNELS = NUM_CLASSES * NUM_SIGMAS          # 35


# ---- deterministic "weight" construction (plain numpy glue) -----------------
def _gauss_1d(size, sigma):
    coords = np.arange(size, dtype=np.float32) - size // 2
    g = np.exp(-(coords ** 2) / (2.0 * sigma ** 2)).astype(np.float32)
    return g / g.sum()


def _conv_matrix(n, sigma):
    # M[i, k] = g[k - i + PAD]; zero-padded conv (pad=PAD, kernel=FILTER_SIZE)
    # of a length-n signal -> length-n output.  Banded (bandwidth 33), stored
    # dense so it can be fed straight to the MXU.
    g = _gauss_1d(FILTER_SIZE, sigma)
    i = np.arange(n)[:, None]
    k = np.arange(n)[None, :]
    idx = k - i + PAD
    valid = (idx >= 0) & (idx < FILTER_SIZE)
    return np.where(valid, g[np.clip(idx, 0, FILTER_SIZE - 1)], 0.0).astype(np.float32)


# ---- task tables (distinct (channel, sigma) pairs + multiplicities) ---------
def _build_task_tables():
    # Grouped-conv quirk of the original module (groups=num_classes, 35 out
    # channels, weights g_masks[7*sigma_idx + class]):
    #   out channel o -> input channel o // 5,  sigma index o // 7.
    cs_mult = {}
    for o in range(OUT_CHANNELS):
        key = (o // NUM_SIGMAS, o // NUM_CLASSES)
        cs_mult[key] = cs_mult.get(key, 0) + 1          # PIcs = prod cs over 35 ch
    l_mult = {}
    for i in range(NUM_CLASSES):
        o = OUT_CHANNELS - 1 - i                        # lM = prod l over last 7 ch
        key = (o // NUM_SIGMAS, o // NUM_CLASSES)
        l_mult[key] = l_mult.get(key, 0) + 1

    # channel-major, sigma-ascending => last task is (c=6, s=4): the largest-
    # sigma matrices are resident when gaussian_l1 is finalized.
    pairs = sorted(cs_mult.keys())
    assert pairs[-1] == (NUM_CLASSES - 1, NUM_SIGMAS - 1)

    seen = set()
    ch, sg, csm, lm, ad = [], [], [], [], []
    for (c, s) in pairs:
        ch.append(c)
        sg.append(s)
        csm.append(cs_mult[(c, s)])                     # 1..5
        lm.append(l_mult.get((c, s), 0))                # 0, 2 or 5
        ad.append(1 if c not in seen else 0)            # add |x-y| once per channel
        seen.add(c)
    assert sum(csm) == OUT_CHANNELS and sum(lm) == NUM_CLASSES and sum(ad) == NUM_CLASSES

    to_i32 = lambda a: jnp.asarray(np.asarray(a, dtype=np.int32))
    return tuple(to_i32(a) for a in (ch, sg, csm, lm, ad))


# ---- the Pallas kernel ------------------------------------------------------
def _make_kernel(h, w):
    f32 = jnp.float32
    n_maps = 5  # x, y, x^2, y^2, x*y

    def kernel(ch_ref, sg_ref, csm_ref, lm_ref, ad_ref,      # scalar prefetch (SMEM)
               x_ref, y_ref, mh_ref, mw_ref,                  # VMEM input blocks
               out_ref,                                       # VMEM output block
               pics_acc, lm_acc, adiff_acc):                  # VMEM scratch
        p = pl.program_id(1)
        n_p = pl.num_programs(1)

        @pl.when(p == 0)
        def _init():
            pics_acc[...] = jnp.ones_like(pics_acc)
            lm_acc[...] = jnp.ones_like(lm_acc)
            adiff_acc[...] = jnp.zeros_like(adiff_acc)

        xc = x_ref[0, 0].astype(f32)      # (h, w) single channel
        yc = y_ref[0, 0].astype(f32)
        mh = mh_ref[0]                    # (h, h) row-blur matrix for this sigma
        mw = mw_ref[0]                    # (w, w) col-blur matrix (symmetric)

        # per-channel moment maps (VPU)
        x2 = xc * xc
        y2 = yc * yc
        xy = xc * yc

        # Fused separable blur of the 5 moment maps in 2 MXU matmuls:
        #   column blur on the vertically stacked (5h, w) slab,
        #   regroup side-by-side, row blur as one (h,h)@(h,5w) matmul.
        slab_v = jnp.concatenate([xc, yc, x2, y2, xy], axis=0)            # (5h, w)
        cslab = jnp.dot(slab_v, mw, preferred_element_type=f32)           # (5h, w)
        cslab_h = jnp.concatenate(
            [cslab[m * h:(m + 1) * h, :] for m in range(n_maps)], axis=1)  # (h, 5w)
        tslab = jnp.dot(mh, cslab_h, preferred_element_type=f32)          # (h, 5w)

        mux = tslab[:, 0 * w:1 * w]
        muy = tslab[:, 1 * w:2 * w]
        bx2 = tslab[:, 2 * w:3 * w]
        by2 = tslab[:, 3 * w:4 * w]
        bxy = tslab[:, 4 * w:5 * w]

        mux2 = mux * mux
        muy2 = muy * muy
        muxy = mux * muy
        sigmax2 = bx2 - mux2
        sigmay2 = by2 - muy2
        sigmaxy = bxy - muxy

        l = (2.0 * muxy + C1) / (mux2 + muy2 + C1)
        cs = (2.0 * sigmaxy + C2) / (sigmax2 + sigmay2 + C2)

        # fold into running products with this pair's multiplicity (0..5)
        def int_pow(v, m):
            v2 = v * v
            v4 = v2 * v2
            one = jnp.ones_like(v)
            r = jnp.where((m & 1) > 0, v, one)
            r = r * jnp.where((m & 2) > 0, v2, one)
            r = r * jnp.where((m & 4) > 0, v4, one)
            return r

        pics_acc[...] = pics_acc[...] * int_pow(cs, csm_ref[p])
        lm_acc[...] = lm_acc[...] * int_pow(l, lm_ref[p])

        # gaussian_l1 is linear in |x - y|: accumulate the channel sum once per
        # channel; the single largest-sigma blur happens at the final task.
        ad = ad_ref[p].astype(f32)
        adiff_acc[...] = adiff_acc[...] + ad * jnp.abs(xc - yc)

        @pl.when(p == n_p - 1)
        def _finalize():
            # last task is (c=6, sigma=8.0) -> mh/mw are the largest-sigma
            # matrices needed by gaussian_l1.
            d = adiff_acc[...] * (1.0 / NUM_CLASSES)
            gl1 = jnp.dot(mh, jnp.dot(d, mw, preferred_element_type=f32),
                          preferred_element_type=f32)
            loss_ms_ssim = 1.0 - lm_acc[...] * pics_acc[...]
            loss_mix = ALPHA * loss_ms_ssim + (1.0 - ALPHA) * gl1 / DATA_RANGE
            out_ref[0] = (COMPENSATION * loss_mix).astype(out_ref.dtype)

    return kernel


# ---- wrapper ----------------------------------------------------------------
def ms_ssim_l1_loss(x, y):
    b, c, h, w = x.shape
    assert c == NUM_CLASSES
    mh = jnp.stack([jnp.asarray(_conv_matrix(h, s)) for s in GAUSSIAN_SIGMAS])
    mw = jnp.stack([jnp.asarray(_conv_matrix(w, s)) for s in GAUSSIAN_SIGMAS])
    ch_tbl, sg_tbl, csm_tbl, lm_tbl, ad_tbl = _build_task_tables()
    n_tasks = int(ch_tbl.shape[0])           # 11 distinct (channel, sigma) pairs

    kernel = _make_kernel(h, w)

    loss_map = pl.pallas_call(
        kernel,
        out_shape=jax.ShapeDtypeStruct((b, h, w), jnp.float32),
        grid_spec=pltpu.PrefetchScalarGridSpec(
            num_scalar_prefetch=5,
            grid=(b, n_tasks),
            in_specs=[
                # one channel of x / y per step, chosen by the prefetched table
                pl.BlockSpec((1, 1, h, w), lambda i, p, ch, sg, *_: (i, ch[p], 0, 0)),
                pl.BlockSpec((1, 1, h, w), lambda i, p, ch, sg, *_: (i, ch[p], 0, 0)),
                # one sigma's blur matrices per step
                pl.BlockSpec((1, h, h), lambda i, p, ch, sg, *_: (sg[p], 0, 0)),
                pl.BlockSpec((1, w, w), lambda i, p, ch, sg, *_: (sg[p], 0, 0)),
            ],
            out_specs=pl.BlockSpec((1, h, w), lambda i, p, *_: (i, 0, 0)),
            scratch_shapes=[
                pltpu.VMEM((h, w), jnp.float32),   # PIcs running product
                pltpu.VMEM((h, w), jnp.float32),   # lM running product
                pltpu.VMEM((h, w), jnp.float32),   # sum_c |x_c - y_c|
            ],
        ),
        compiler_params=pltpu.CompilerParams(
            dimension_semantics=("parallel", "arbitrary"),
            vmem_limit_bytes=64 * 1024 * 1024,
        ),
    )(ch_tbl, sg_tbl, csm_tbl, lm_tbl, ad_tbl, x, y, mh, mw)

    # final trivial scalar reduction (mean over b, H, W) in plain JAX glue.
    return loss_map.mean()


# ---- pure-JAX reference (direct grouped 2D conv) for a correctness check ----
def _reference_loss(x, y):
    g2d = [np.outer(_gauss_1d(FILTER_SIZE, s), _gauss_1d(FILTER_SIZE, s))
           for s in GAUSSIAN_SIGMAS]
    gm = np.zeros((OUT_CHANNELS, 1, FILTER_SIZE, FILTER_SIZE), np.float32)
    for idx in range(NUM_SIGMAS):
        for j in range(NUM_CLASSES):
            gm[NUM_CLASSES * idx + j, 0] = g2d[idx]
    gm = jnp.asarray(gm)

    def conv(inp, w, groups):
        return jax.lax.conv_general_dilated(
            inp, w, window_strides=(1, 1),
            padding=((PAD, PAD), (PAD, PAD)),
            dimension_numbers=("NCHW", "OIHW", "NCHW"),
            feature_group_count=groups)

    mux = conv(x, gm, NUM_CLASSES)
    muy = conv(y, gm, NUM_CLASSES)
    mux2, muy2, muxy = mux * mux, muy * muy, mux * muy
    sigmax2 = conv(x * x, gm, NUM_CLASSES) - mux2
    sigmay2 = conv(y * y, gm, NUM_CLASSES) - muy2
    sigmaxy = conv(x * y, gm, NUM_CLASSES) - muxy
    l = (2 * muxy + C1) / (mux2 + muy2 + C1)
    cs = (2 * sigmaxy + C2) / (sigmax2 + sigmay2 + C2)
    lM = 1.0
    for i in range(NUM_CLASSES):
        lM = lM * l[:, -i - 1, :, :]
    PIcs = jnp.prod(cs, axis=1)
    loss_ms_ssim = 1 - lM * PIcs
    gaussian_l1 = conv(jnp.abs(x - y), gm[-NUM_CLASSES:], NUM_CLASSES).mean(axis=1)
    loss_mix = ALPHA * loss_ms_ssim + (1 - ALPHA) * gaussian_l1 / DATA_RANGE
    return (COMPENSATION * loss_mix).mean()


if __name__ == "__main__":
    key = jax.random.PRNGKey(0)
    kx, ky = jax.random.split(key)
    b, c, h, w = 2, NUM_CLASSES, 16, 16
    x = jax.random.uniform(kx, (b, c, h, w), dtype=jnp.float32)
    y = jax.random.uniform(ky, (b, c, h, w), dtype=jnp.float32)

    loss = ms_ssim_l1_loss(x, y)
    jax.block_until_ready(loss)

    ref = _reference_loss(x, y)
    np.testing.assert_allclose(np.asarray(loss), np.asarray(ref),
                               rtol=1e-3, atol=1e-3)
    print("KERNEL_OK")
</pallas_src>

<mosaic_0001>
module attributes {stable_mosaic.version = 11 : i64} {
  func.func @kernel(%arg0: i32, %arg1: i32, %arg2: memref<11xi32, #tpu.memory_space<smem>>, %arg3: memref<11xi32, #tpu.memory_space<smem>>, %arg4: memref<11xi32, #tpu.memory_space<smem>>, %arg5: memref<11xi32, #tpu.memory_space<smem>>, %arg6: memref<11xi32, #tpu.memory_space<smem>>, %arg7: memref<1x1x16x16xf32, #tpu.memory_space<vmem>>, %arg8: memref<1x1x16x16xf32, #tpu.memory_space<vmem>>, %arg9: memref<1x16x16xf32, #tpu.memory_space<vmem>>, %arg10: memref<1x16x16xf32, #tpu.memory_space<vmem>>, %arg11: memref<1x16x16xf32, #tpu.memory_space<vmem>>, %arg12: memref<16x16xf32, #tpu.memory_space<vmem>>, %arg13: memref<16x16xf32, #tpu.memory_space<vmem>>, %arg14: memref<16x16xf32, #tpu.memory_space<vmem>>) attributes {dimension_semantics = [#tpu.dimension_semantics<parallel>, #tpu.dimension_semantics<arbitrary>], iteration_bounds = array<i64: 2, 11>, scalar_prefetch = 5 : i64, scratch_operands = 3 : i64, tpu.core_type = #tpu.core_type<tc>, window_params = [{transform_indices = @transform_0, window_bounds = array<i64: 1, 1, 16, 16>}, {transform_indices = @transform_1, window_bounds = array<i64: 1, 1, 16, 16>}, {transform_indices = @transform_2, window_bounds = array<i64: 1, 16, 16>}, {transform_indices = @transform_3, window_bounds = array<i64: 1, 16, 16>}, {transform_indices = @transform_4, window_bounds = array<i64: 1, 16, 16>}]} {
    %c0_i32 = arith.constant 0 : i32
    %0 = arith.cmpi eq, %arg1, %c0_i32 : i32
    %1 = arith.extui %0 : i1 to i32
    %c0_i32_0 = arith.constant 0 : i32
    %2 = arith.cmpi ne, %1, %c0_i32_0 : i32
    scf.if %2 {
      %cst_45 = arith.constant 1.000000e+00 : f32
      %101 = vector.broadcast %cst_45 : f32 to vector<16x16xf32>
      %c0_46 = arith.constant 0 : index
      %c0_47 = arith.constant 0 : index
      %102 = vector.load %arg12[%c0_46, %c0_47] : memref<16x16xf32, #tpu.memory_space<vmem>>, vector<16x16xf32>
      tpu.vector_store %arg12[%c0_46, %c0_47], %101 {strides = array<i32>} : memref<16x16xf32, #tpu.memory_space<vmem>>, vector<16x16xf32>,
      %cst_48 = arith.constant 1.000000e+00 : f32
      %103 = vector.broadcast %cst_48 : f32 to vector<16x16xf32>
      %c0_49 = arith.constant 0 : index
      %c0_50 = arith.constant 0 : index
      %104 = vector.load %arg13[%c0_49, %c0_50] : memref<16x16xf32, #tpu.memory_space<vmem>>, vector<16x16xf32>
      tpu.vector_store %arg13[%c0_49, %c0_50], %103 {strides = array<i32>} : memref<16x16xf32, #tpu.memory_space<vmem>>, vector<16x16xf32>,
      %cst_51 = arith.constant 0.000000e+00 : f32
      %105 = vector.broadcast %cst_51 : f32 to vector<16x16xf32>
      %c0_52 = arith.constant 0 : index
      %c0_53 = arith.constant 0 : index
      %106 = vector.load %arg14[%c0_52, %c0_53] : memref<16x16xf32, #tpu.memory_space<vmem>>, vector<16x16xf32>
      tpu.vector_store %arg14[%c0_52, %c0_53], %105 {strides = array<i32>} : memref<16x16xf32, #tpu.memory_space<vmem>>, vector<16x16xf32>,
    } else {
    }
    %c0 = arith.constant 0 : index
    %c0_1 = arith.constant 0 : index
    %c0_2 = arith.constant 0 : index
    %c0_3 = arith.constant 0 : index
    %3 = vector.load %arg7[%c0, %c0_1, %c0_2, %c0_3] : memref<1x1x16x16xf32, #tpu.memory_space<vmem>>, vector<1x1x16x16xf32>
    %4 = vector.shape_cast %3 : vector<1x1x16x16xf32> to vector<16x16xf32>
    %c0_4 = arith.constant 0 : index
    %c0_5 = arith.constant 0 : index
    %c0_6 = arith.constant 0 : index
    %c0_7 = arith.constant 0 : index
    %5 = vector.load %arg8[%c0_4, %c0_5, %c0_6, %c0_7] : memref<1x1x16x16xf32, #tpu.memory_space<vmem>>, vector<1x1x16x16xf32>
    %6 = vector.shape_cast %5 : vector<1x1x16x16xf32> to vector<16x16xf32>
    %c0_8 = arith.constant 0 : index
    %c0_9 = arith.constant 0 : index
    %c0_10 = arith.constant 0 : index
    %7 = vector.load %arg9[%c0_8, %c0_9, %c0_10] : memref<1x16x16xf32, #tpu.memory_space<vmem>>, vector<1x16x16xf32>
    %8 = vector.shape_cast %7 : vector<1x16x16xf32> to vector<16x16xf32>
    %c0_11 = arith.constant 0 : index
    %c0_12 = arith.constant 0 : index
    %c0_13 = arith.constant 0 : index
    %9 = vector.load %arg10[%c0_11, %c0_12, %c0_13] : memref<1x16x16xf32, #tpu.memory_space<vmem>>, vector<1x16x16xf32>
    %10 = vector.shape_cast %9 : vector<1x16x16xf32> to vector<16x16xf32>
    %11 = arith.mulf %4, %4 : vector<16x16xf32>
    %12 = arith.mulf %6, %6 : vector<16x16xf32>
    %13 = arith.mulf %4, %6 : vector<16x16xf32>
    %14 = tpu.concatenate %4, %6, %11, %12, %13 in 0 : vector<16x16xf32>, vector<16x16xf32>, vector<16x16xf32>, vector<16x16xf32>, vector<16x16xf32> -> vector<80x16xf32>
    %cst = arith.constant dense<0.000000e+00> : vector<80x16xf32>
    %15 = tpu.matmul %14, %10, %cst {dimension_numbers = #tpu.dot_dimension_numbers<[1], [0], [0], [1], [0, 0, 1, 1], [], []>} : vector<80x16xf32>, vector<16x16xf32>, vector<80x16xf32> -> vector<80x16xf32>
    %16 = vector.extract_strided_slice %15 {offsets = [0, 0], sizes = [16, 16], strides = [1, 1]} : vector<80x16xf32> to vector<16x16xf32>
    %17 = vector.extract_strided_slice %15 {offsets = [16, 0], sizes = [16, 16], strides = [1, 1]} : vector<80x16xf32> to vector<16x16xf32>
    %18 = vector.extract_strided_slice %15 {offsets = [32, 0], sizes = [16, 16], strides = [1, 1]} : vector<80x16xf32> to vector<16x16xf32>
    %19 = vector.extract_strided_slice %15 {offsets = [48, 0], sizes = [16, 16], strides = [1, 1]} : vector<80x16xf32> to vector<16x16xf32>
    %20 = vector.extract_strided_slice %15 {offsets = [64, 0], sizes = [16, 16], strides = [1, 1]} : vector<80x16xf32> to vector<16x16xf32>
    %21 = tpu.concatenate %16, %17, %18, %19, %20 in 1 : vector<16x16xf32>, vector<16x16xf32>, vector<16x16xf32>, vector<16x16xf32>, vector<16x16xf32> -> vector<16x80xf32>
    %cst_14 = arith.constant dense<0.000000e+00> : vector<16x80xf32>
    %22 = tpu.matmul %8, %21, %cst_14 {dimension_numbers = #tpu.dot_dimension_numbers<[1], [0], [0], [1], [0, 0, 1, 1], [], []>} : vector<16x16xf32>, vector<16x80xf32>, vector<16x80xf32> -> vector<16x80xf32>
    %23 = vector.extract_strided_slice %22 {offsets = [0, 0], sizes = [16, 16], strides = [1, 1]} : vector<16x80xf32> to vector<16x16xf32>
    %24 = vector.extract_strided_slice %22 {offsets = [0, 16], sizes = [16, 16], strides = [1, 1]} : vector<16x80xf32> to vector<16x16xf32>
    %25 = vector.extract_strided_slice %22 {offsets = [0, 32], sizes = [16, 16], strides = [1, 1]} : vector<16x80xf32> to vector<16x16xf32>
    %26 = vector.extract_strided_slice %22 {offsets = [0, 48], sizes = [16, 16], strides = [1, 1]} : vector<16x80xf32> to vector<16x16xf32>
    %27 = vector.extract_strided_slice %22 {offsets = [0, 64], sizes = [16, 16], strides = [1, 1]} : vector<16x80xf32> to vector<16x16xf32>
    %28 = arith.mulf %23, %23 : vector<16x16xf32>
    %29 = arith.mulf %24, %24 : vector<16x16xf32>
    %30 = arith.mulf %23, %24 : vector<16x16xf32>
    %31 = arith.subf %25, %28 : vector<16x16xf32>
    %32 = arith.subf %26, %29 : vector<16x16xf32>
    %33 = arith.subf %27, %30 : vector<16x16xf32>
    %cst_15 = arith.constant 2.000000e+00 : f32
    %34 = vector.broadcast %cst_15 : f32 to vector<16x16xf32>
    %35 = arith.mulf %34, %30 : vector<16x16xf32>
    %cst_16 = arith.constant 9.99999974E-5 : f32
    %36 = vector.broadcast %cst_16 : f32 to vector<16x16xf32>
    %37 = arith.addf %35, %36 : vector<16x16xf32>
    %38 = arith.addf %28, %29 : vector<16x16xf32>
    %cst_17 = arith.constant 9.99999974E-5 : f32
    %39 = vector.broadcast %cst_17 : f32 to vector<16x16xf32>
    %40 = arith.addf %38, %39 : vector<16x16xf32>
    %41 = arith.divf %37, %40 : vector<16x16xf32>
    %cst_18 = arith.constant 2.000000e+00 : f32
    %42 = vector.broadcast %cst_18 : f32 to vector<16x16xf32>
    %43 = arith.mulf %42, %33 : vector<16x16xf32>
    %cst_19 = arith.constant 8.99999984E-4 : f32
    %44 = vector.broadcast %cst_19 : f32 to vector<16x16xf32>
    %45 = arith.addf %43, %44 : vector<16x16xf32>
    %46 = arith.addf %31, %32 : vector<16x16xf32>
    %cst_20 = arith.constant 8.99999984E-4 : f32
    %47 = vector.broadcast %cst_20 : f32 to vector<16x16xf32>
    %48 = arith.addf %46, %47 : vector<16x16xf32>
    %49 = arith.divf %45, %48 : vector<16x16xf32>
    %c0_21 = arith.constant 0 : index
    %c0_22 = arith.constant 0 : index
    %50 = vector.load %arg12[%c0_21, %c0_22] : memref<16x16xf32, #tpu.memory_space<vmem>>, vector<16x16xf32>
    %51 = arith.index_cast %arg1 : i32 to index
    %52 = memref.load %arg4[%51] : memref<11xi32, #tpu.memory_space<smem>>
    %53 = arith.mulf %49, %49 : vector<16x16xf32>
    %54 = arith.mulf %53, %53 : vector<16x16xf32>
    %cst_23 = arith.constant 1.000000e+00 : f32
    %55 = vector.broadcast %cst_23 : f32 to vector<16x16xf32>
    %c1_i32 = arith.constant 1 : i32
    %56 = arith.andi %52, %c1_i32 : i32
    %c0_i32_24 = arith.constant 0 : i32
    %57 = arith.cmpi sgt, %56, %c0_i32_24 : i32
    %58 = arith.select %57, %49, %55 : vector<16x16xf32>
    %c2_i32 = arith.constant 2 : i32
    %59 = arith.andi %52, %c2_i32 : i32
    %c0_i32_25 = arith.constant 0 : i32
    %60 = arith.cmpi sgt, %59, %c0_i32_25 : i32
    %61 = arith.select %60, %53, %55 : vector<16x16xf32>
    %62 = arith.mulf %58, %61 : vector<16x16xf32>
    %c4_i32 = arith.constant 4 : i32
    %63 = arith.andi %52, %c4_i32 : i32
    %c0_i32_26 = arith.constant 0 : i32
    %64 = arith.cmpi sgt, %63, %c0_i32_26 : i32
    %65 = arith.select %64, %54, %55 : vector<16x16xf32>
    %66 = arith.mulf %62, %65 : vector<16x16xf32>
    %67 = arith.mulf %50, %66 : vector<16x16xf32>
    %c0_27 = arith.constant 0 : index
    %c0_28 = arith.constant 0 : index
    %68 = vector.load %arg12[%c0_27, %c0_28] : memref<16x16xf32, #tpu.memory_space<vmem>>, vector<16x16xf32>
    tpu.vector_store %arg12[%c0_27, %c0_28], %67 {strides = array<i32>} : memref<16x16xf32, #tpu.memory_space<vmem>>, vector<16x16xf32>,
    %c0_29 = arith.constant 0 : index
    %c0_30 = arith.constant 0 : index
    %69 = vector.load %arg13[%c0_29, %c0_30] : memref<16x16xf32, #tpu.memory_space<vmem>>, vector<16x16xf32>
    %70 = arith.index_cast %arg1 : i32 to index
    %71 = memref.load %arg5[%70] : memref<11xi32, #tpu.memory_space<smem>>
    %72 = arith.mulf %41, %41 : vector<16x16xf32>
    %73 = arith.mulf %72, %72 : vector<16x16xf32>
    %cst_31 = arith.constant 1.000000e+00 : f32
    %74 = vector.broadcast %cst_31 : f32 to vector<16x16xf32>
    %c1_i32_32 = arith.constant 1 : i32
    %75 = arith.andi %71, %c1_i32_32 : i32
    %c0_i32_33 = arith.constant 0 : i32
    %76 = arith.cmpi sgt, %75, %c0_i32_33 : i32
    %77 = arith.select %76, %41, %74 : vector<16x16xf32>
    %c2_i32_34 = arith.constant 2 : i32
    %78 = arith.andi %71, %c2_i32_34 : i32
    %c0_i32_35 = arith.constant 0 : i32
    %79 = arith.cmpi sgt, %78, %c0_i32_35 : i32
    %80 = arith.select %79, %72, %74 : vector<16x16xf32>
    %81 = arith.mulf %77, %80 : vector<16x16xf32>
    %c4_i32_36 = arith.constant 4 : i32
    %82 = arith.andi %71, %c4_i32_36 : i32
    %c0_i32_37 = arith.constant 0 : i32
    %83 = arith.cmpi sgt, %82, %c0_i32_37 : i32
    %84 = arith.select %83, %73, %74 : vector<16x16xf32>
    %85 = arith.mulf %81, %84 : vector<16x16xf32>
    %86 = arith.mulf %69, %85 : vector<16x16xf32>
    %c0_38 = arith.constant 0 : index
    %c0_39 = arith.constant 0 : index
    %87 = vector.load %arg13[%c0_38, %c0_39] : memref<16x16xf32, #tpu.memory_space<vmem>>, vector<16x16xf32>
    tpu.vector_store %arg13[%c0_38, %c0_39], %86 {strides = array<i32>} : memref<16x16xf32, #tpu.memory_space<vmem>>, vector<16x16xf32>,
    %88 = arith.index_cast %arg1 : i32 to index
    %89 = memref.load %arg6[%88] : memref<11xi32, #tpu.memory_space<smem>>
    %90 = arith.sitofp %89 : i32 to f32
    %c0_40 = arith.constant 0 : index
    %c0_41 = arith.constant 0 : index
    %91 = vector.load %arg14[%c0_40, %c0_41] : memref<16x16xf32, #tpu.memory_space<vmem>>, vector<16x16xf32>
    %92 = arith.subf %4, %6 : vector<16x16xf32>
    %93 = math.absf %92 : vector<16x16xf32>
    %94 = vector.broadcast %90 : f32 to vector<16x16xf32>
    %95 = arith.mulf %94, %93 : vector<16x16xf32>
    %96 = arith.addf %91, %95 : vector<16x16xf32>
    %c0_42 = arith.constant 0 : index
    %c0_43 = arith.constant 0 : index
    %97 = vector.load %arg14[%c0_42, %c0_43] : memref<16x16xf32, #tpu.memory_space<vmem>>, vector<16x16xf32>
    tpu.vector_store %arg14[%c0_42, %c0_43], %96 {strides = array<i32>} : memref<16x16xf32, #tpu.memory_space<vmem>>, vector<16x16xf32>,
    %c10_i32 = arith.constant 10 : i32
    %98 = arith.cmpi eq, %arg1, %c10_i32 : i32
    %99 = arith.extui %98 : i1 to i32
    %c0_i32_44 = arith.constant 0 : i32
    %100 = arith.cmpi ne, %99, %c0_i32_44 : i32
    scf.if %100 {
      %c0_45 = arith.constant 0 : index
      %c0_46 = arith.constant 0 : index
      %101 = vector.load %arg14[%c0_45, %c0_46] : memref<16x16xf32, #tpu.memory_space<vmem>>, vector<16x16xf32>
      %cst_47 = arith.constant 0.142857149 : f32
      %102 = vector.broadcast %cst_47 : f32 to vector<16x16xf32>
      %103 = arith.mulf %101, %102 : vector<16x16xf32>
      %cst_48 = arith.constant dense<0.000000e+00> : vector<16x16xf32>
      %104 = tpu.matmul %103, %10, %cst_48 {dimension_numbers = #tpu.dot_dimension_numbers<[1], [0], [0], [1], [0, 0, 1, 1], [], []>} : vector<16x16xf32>, vector<16x16xf32>, vector<16x16xf32> -> vector<16x16xf32>
      %cst_49 = arith.constant dense<0.000000e+00> : vector<16x16xf32>
      %105 = tpu.matmul %8, %104, %cst_49 {dimension_numbers = #tpu.dot_dimension_numbers<[1], [0], [0], [1], [0, 0, 1, 1], [], []>} : vector<16x16xf32>, vector<16x16xf32>, vector<16x16xf32> -> vector<16x16xf32>
      %c0_50 = arith.constant 0 : index
      %c0_51 = arith.constant 0 : index
      %106 = vector.load %arg13[%c0_50, %c0_51] : memref<16x16xf32, #tpu.memory_space<vmem>>, vector<16x16xf32>
      %c0_52 = arith.constant 0 : index
      %c0_53 = arith.constant 0 : index
      %107 = vector.load %arg12[%c0_52, %c0_53] : memref<16x16xf32, #tpu.memory_space<vmem>>, vector<16x16xf32>
      %108 = arith.mulf %106, %107 : vector<16x16xf32>
      %cst_54 = arith.constant 1.000000e+00 : f32
      %109 = vector.broadcast %cst_54 : f32 to vector<16x16xf32>
      %110 = arith.subf %109, %108 : vector<16x16xf32>
      %cst_55 = arith.constant 0.839999973 : f32
      %111 = vector.broadcast %cst_55 : f32 to vector<16x16xf32>
      %112 = arith.mulf %111, %110 : vector<16x16xf32>
      %cst_56 = arith.constant 1.600000e-01 : f32
      %113 = vector.broadcast %cst_56 : f32 to vector<16x16xf32>
      %114 = arith.mulf %113, %105 : vector<16x16xf32>
      %cst_57 = arith.constant 1.000000e+00 : f32
      %115 = vector.broadcast %cst_57 : f32 to vector<16x16xf32>
      %116 = arith.divf %114, %115 : vector<16x16xf32>
      %117 = arith.addf %112, %116 : vector<16x16xf32>
      %cst_58 = arith.constant 2.000000e+02 : f32
      %118 = vector.broadcast %cst_58 : f32 to vector<16x16xf32>
      %119 = arith.mulf %118, %117 : vector<16x16xf32>
      %c0_59 = arith.constant 0 : index
      %c0_60 = arith.constant 0 : index
      %c0_61 = arith.constant 0 : index
      %120 = vector.load %arg11[%c0_59, %c0_60, %c0_61] : memref<1x16x16xf32, #tpu.memory_space<vmem>>, vector<1x16x16xf32>
      %121 = vector.shape_cast %120 : vector<1x16x16xf32> to vector<16x16xf32>
      %122 = vector.shape_cast %119 : vector<16x16xf32> to vector<1x16x16xf32>
      tpu.vector_store %arg11[%c0_59, %c0_60, %c0_61], %122 {strides = array<i32>} : memref<1x16x16xf32, #tpu.memory_space<vmem>>, vector<1x16x16xf32>,
    } else {
    }
    return
  }
  func.func @transform_0(%arg0: i32, %arg1: i32, %arg2: memref<11xi32, #tpu.memory_space<smem>>, %arg3: memref<11xi32, #tpu.memory_space<smem>>, %arg4: memref<11xi32, #tpu.memory_space<smem>>, %arg5: memref<11xi32, #tpu.memory_space<smem>>, %arg6: memref<11xi32, #tpu.memory_space<smem>>) -> (i32, i32, i32, i32) {
    %0 = arith.index_cast %arg1 : i32 to index
    %1 = memref.load %arg2[%0] : memref<11xi32, #tpu.memory_space<smem>>
    %c0_i32 = arith.constant 0 : i32
    %c0_i32_0 = arith.constant 0 : i32
    %c0_i32_1 = arith.constant 0 : i32
    return %arg0, %1, %c0_i32, %c0_i32_0 : i32, i32, i32, i32
  }
  func.func @transform_1(%arg0: i32, %arg1: i32, %arg2: memref<11xi32, #tpu.memory_space<smem>>, %arg3: memref<11xi32, #tpu.memory_space<smem>>, %arg4: memref<11xi32, #tpu.memory_space<smem>>, %arg5: memref<11xi32, #tpu.memory_space<smem>>, %arg6: memref<11xi32, #tpu.memory_space<smem>>) -> (i32, i32, i32, i32) {
    %0 = arith.index_cast %arg1 : i32 to index
    %1 = memref.load %arg2[%0] : memref<11xi32, #tpu.memory_space<smem>>
    %c0_i32 = arith.constant 0 : i32
    %c0_i32_0 = arith.constant 0 : i32
    %c0_i32_1 = arith.constant 0 : i32
    return %arg0, %1, %c0_i32, %c0_i32_0 : i32, i32, i32, i32
  }
  func.func @transform_2(%arg0: i32, %arg1: i32, %arg2: memref<11xi32, #tpu.memory_space<smem>>, %arg3: memref<11xi32, #tpu.memory_space<smem>>, %arg4: memref<11xi32, #tpu.memory_space<smem>>, %arg5: memref<11xi32, #tpu.memory_space<smem>>, %arg6: memref<11xi32, #tpu.memory_space<smem>>) -> (i32, i32, i32) {
    %0 = arith.index_cast %arg1 : i32 to index
    %1 = memref.load %arg3[%0] : memref<11xi32, #tpu.memory_space<smem>>
    %c0_i32 = arith.constant 0 : i32
    %c0_i32_0 = arith.constant 0 : i32
    %c0_i32_1 = arith.constant 0 : i32
    return %1, %c0_i32, %c0_i32_0 : i32, i32, i32
  }
  func.func @transform_3(%arg0: i32, %arg1: i32, %arg2: memref<11xi32, #tpu.memory_space<smem>>, %arg3: memref<11xi32, #tpu.memory_space<smem>>, %arg4: memref<11xi32, #tpu.memory_space<smem>>, %arg5: memref<11xi32, #tpu.memory_space<smem>>, %arg6: memref<11xi32, #tpu.memory_space<smem>>) -> (i32, i32, i32) {
    %0 = arith.index_cast %arg1 : i32 to index
    %1 = memref.load %arg3[%0] : memref<11xi32, #tpu.memory_space<smem>>
    %c0_i32 = arith.constant 0 : i32
    %c0_i32_0 = arith.constant 0 : i32
    %c0_i32_1 = arith.constant 0 : i32
    return %1, %c0_i32, %c0_i32_0 : i32, i32, i32
  }
  func.func @transform_4(%arg0: i32, %arg1: i32, %arg2: memref<11xi32, #tpu.memory_space<smem>>, %arg3: memref<11xi32, #tpu.memory_space<smem>>, %arg4: memref<11xi32, #tpu.memory_space<smem>>, %arg5: memref<11xi32, #tpu.memory_space<smem>>, %arg6: memref<11xi32, #tpu.memory_space<smem>>) -> (i32, i32, i32) {
    %c0_i32 = arith.constant 0 : i32
    %c0_i32_0 = arith.constant 0 : i32
    %c0_i32_1 = arith.constant 0 : i32
    return %arg0, %c0_i32, %c0_i32_0 : i32, i32, i32
  }
}

</mosaic_0001>

<llo_original>
// kernel: tpu_custom_call.1
$region0: #{tpu_custom_call.1}
  #allocation0 [shape = 'u32[]', space=smem, size = 0x4, offset = 0x4, fixed_abs, tag = 'smem constant byte address 0x4 - core index']
  #allocation1 [shape = 'u32[144,128]{1,0:T(1,128)}', space=vmem, size = 0x12000, scoped, tag = 'internal scratch']
  #allocation2 [shape = 'f32[16,16]{1,0:T(8,128)}', space=vmem, size = 0x2000, scoped, tag = 'scratch operand']
  #allocation3 [shape = 'f32[16,16]{1,0:T(8,128)}', space=vmem, size = 0x2000, scoped, tag = 'scratch operand']
  #allocation4 [shape = 'f32[16,16]{1,0:T(8,128)}', space=vmem, size = 0x2000, scoped, tag = 'scratch operand']
  #allocation5 [shape = 's32[1]{0}', space=sflag, size = 0x4, scoped, tag = 'scoped memory for tpu_custom_call.1']
  #allocation6 [shape = 'u8[512]{0}', space=smem, size = 0x200, scoped, tag = 'prefetched SMEM operand 0']
  #allocation7 [shape = 'u8[512]{0}', space=smem, size = 0x200, scoped, tag = 'prefetched SMEM operand 1']
  #allocation8 [shape = 'u8[512]{0}', space=smem, size = 0x200, scoped, tag = 'prefetched SMEM operand 2']
  #allocation9 [shape = 'u8[512]{0}', space=smem, size = 0x200, scoped, tag = 'prefetched SMEM operand 3']
  #allocation10 [shape = 'u8[512]{0}', space=smem, size = 0x200, scoped, tag = 'prefetched SMEM operand 4']
  %s0 = inlined_call_operand.hbm [shape: s32[11], index: 0, kind: input, shape index: {}]
  %s1 = inlined_call_operand.hbm [shape: s32[11], index: 1, kind: input, shape index: {}]
  %s2 = inlined_call_operand.hbm [shape: s32[11], index: 2, kind: input, shape index: {}]
  %s3 = inlined_call_operand.hbm [shape: s32[11], index: 3, kind: input, shape index: {}]
  %s4 = inlined_call_operand.hbm [shape: s32[11], index: 4, kind: input, shape index: {}]
  %s5 = inlined_call_operand.hbm [shape: f32[2,7,16,16], index: 5, kind: input, shape index: {}]
  %s6 = inlined_call_operand.hbm [shape: f32[2,7,16,16], index: 6, kind: input, shape index: {}]
  %s7 = inlined_call_operand.hbm [shape: f32[5,16,16], index: 7, kind: input, shape index: {}]
  %s8 = inlined_call_operand.hbm [shape: f32[5,16,16], index: 8, kind: input, shape index: {}]
  %s9 = inlined_call_operand.hbm [shape: f32[2,16,16], index: 9, kind: output, shape index: {}]
  %s10 = sld [smem:[#allocation0]]
  $region73: #{tpu_custom_call.1} parent=0
    _
  %s12 = ssub.s32 1, %s10
  %s13 = scalar_select 0, %s12, %s10
  %15 = dma.hbm_to_smem %s0, 16, [#allocation6], [#allocation5]
  %17 = dma.hbm_to_smem %s1, 16, [#allocation7], [#allocation5]
  %19 = dma.hbm_to_smem %s2, 16, [#allocation8], [#allocation5]
  %21 = dma.hbm_to_smem %s3, 16, [#allocation9], [#allocation5]
  %23 = dma.hbm_to_smem %s4, 16, [#allocation10], [#allocation5]
  %24 = dma.done [#allocation5], 80
  %25 = sfence
  $region1: #{tpu_custom_call.1} parent=0
    #allocation11 [shape = 'u8[16384]{0}', space=vmem, size = 0x4000, scoped, tag = 'input window, operand 5']
    #allocation12 [shape = 's32[2]{0}', space=sflag, size = 0x8, scoped, tag = 'scoped memory for tpu_custom_call.1']
    #allocation13 [shape = 's32[2]{0}', space=sflag, size = 0x8, scoped, tag = 'scoped memory for tpu_custom_call.1']
    #allocation14 [shape = 'u8[16384]{0}', space=vmem, size = 0x4000, scoped, tag = 'input window, operand 6']
    #allocation15 [shape = 's32[2]{0}', space=sflag, size = 0x8, scoped, tag = 'scoped memory for tpu_custom_call.1']
    #allocation16 [shape = 'u8[16384]{0}', space=vmem, size = 0x4000, scoped, tag = 'input window, operand 7']
    #allocation17 [shape = 'u8[16384]{0}', space=vmem, size = 0x4000, scoped, tag = 'input window, operand 8']
    #allocation18 [shape = 's32[2]{0}', space=sflag, size = 0x8, scoped, tag = 'scoped memory for tpu_custom_call.1']
    #allocation19 [shape = 'u8[16384]{0}', space=vmem, size = 0x4000, scoped, tag = 'output window, operand 0']
    %26 = vsyncpa [#allocation12], 0
    %s27 = scalar_lea.sflag [#allocation12], 1
    %28 = vsyncpa %s27, 0
    %29 = vsyncpa [#allocation15], 0
    %s30 = scalar_lea.sflag [#allocation15], 1
    %31 = vsyncpa %s30, 0
    %32 = vsyncpa [#allocation18], 0
    %s33 = scalar_lea.sflag [#allocation18], 1
    %34 = vsyncpa %s33, 0
    %35 = vsyncpa [#allocation13], 0
    %s36 = scalar_lea.sflag [#allocation13], 1
    %37 = vsyncpa %s36, 0
    loop: start=0, step=1, limit=24
    $region2: #{tpu_custom_call.1} parent=1 // loop_pre_header
      _
    $region3: #{tpu_custom_call.1} parent=1 // loop_header
      %s39 = sphi 0, %s43
      %p40 = scmp.ge.s32.totalorder %s39, 24
      %s46 = sphi 0, %s58
      %s47 = sphi 0, %s54
      %s48 = sphi 0, %s46
      %s49 = sphi 0, %s47
      %s50 = sphi 0, %s48
      %s51 = sphi 0, %s49
      %s65 = sphi 0, %s67
      %s68 = sphi 0, %s65
      %s69 = sphi 0, %s68
      %s85 = sphi 0, %s69
      %s95 = sphi 0, %s97
      %s98 = sphi 0, %s95
      %s99 = sphi 0, %s98
      %s115 = sphi 0, %s99
      %s123 = sphi 0, %s125
      %s126 = sphi 0, %s123
      %s127 = sphi 0, %s126
      %s143 = sphi 0, %s127
      %s151 = sphi 0, %s153
      %s154 = sphi 0, %s151
      %s155 = sphi 0, %s154
      %s171 = sphi 0, %s155
      %s177 = sphi 0, %s179
      %s180 = sphi 0, %s177
      %s181 = sphi 0, %s180
      %s197 = sphi 0, %s181
    $region4: #{tpu_custom_call.1} parent=1 // loop_header_branch
      %42 = sbr.rel (%p40) target = $region8
    $region5: #{tpu_custom_call.1} parent=1 // loop_body
      %s44 = ssub.s32 %s39, 1
      %s45 = ssub.s32 %s39, 2
      %s52 = sadd.s32 1, %s47
      %p53 = scmp.ge.s32.totalorder %s52, 11
      %s54 = scalar_select %p53, 0, %s52
      %s55 = sadd.s32 1, %s46
      %s56 = scalar_select %p53, %s55, %s46
      %p57 = scmp.ge.s32.totalorder %s56, 2
      %s58 = scalar_select %p57, 0, %s56
      %s59 = sld [smem:[#allocation6 + %s47]]
      %s60 = sld [smem:[#allocation6 + %s54]]
      %s61 = ssub.s32 %s46, %s58
      %s62 = ssub.s32 %s59, %s60
      %s63 = sor.u32 %s61, %s62
      %p64 = scmp.eq.s32.totalorder %s63, 0
      %s66 = sadd.s32 %s65, 1
      %s67 = scalar_select %p64, %s65, %s66
      %p70 = pneg %p64
      %p71 = scmp.eq.s32.totalorder %s39, 21
      %p72 = por %p70, %p71
      %p73 = scmp.ne.s32.totalorder %s65, %s68
      %p74 = scmp.eq.s32.totalorder %s39, 0
      %p75 = por %p73, %p74
      %p76 = scmp.ne.s32.totalorder %s65, %s68
      %p77 = scmp.eq.s32.totalorder %s44, 21
      %p78 = por %p76, %p77
      %p79 = scmp.ne.s32.totalorder %s68, %s69
      %p80 = scmp.eq.s32.totalorder %s44, 0
      %p81 = por %p79, %p80
      %p82 = scmp.ne.s32.totalorder %s68, %s69
      %p83 = scmp.eq.s32.totalorder %s45, 21
      %p84 = por %p82, %p83
      %p86 = scmp.ne.s32.totalorder %s69, %s85
      %p87 = scmp.eq.s32.totalorder %s45, 0
      %p88 = por %p86, %p87
      %s89 = sld [smem:[#allocation6 + %s47]]
      %s90 = sld [smem:[#allocation6 + %s54]]
      %s91 = ssub.s32 %s46, %s58
      %s92 = ssub.s32 %s89, %s90
      %s93 = sor.u32 %s91, %s92
      %p94 = scmp.eq.s32.totalorder %s93, 0
      %s96 = sadd.s32 %s95, 1
      %s97 = scalar_select %p94, %s95, %s96
      %p100 = pneg %p94
      %p101 = scmp.eq.s32.totalorder %s39, 21
      %p102 = por %p100, %p101
      %p103 = scmp.ne.s32.totalorder %s95, %s98
      %p104 = scmp.eq.s32.totalorder %s39, 0
      %p105 = por %p103, %p104
      %p106 = scmp.ne.s32.totalorder %s95, %s98
      %p107 = scmp.eq.s32.totalorder %s44, 21
      %p108 = por %p106, %p107
      %p109 = scmp.ne.s32.totalorder %s98, %s99
      %p110 = scmp.eq.s32.totalorder %s44, 0
      %p111 = por %p109, %p110
      %p112 = scmp.ne.s32.totalorder %s98, %s99
      %p113 = scmp.eq.s32.totalorder %s45, 21
      %p114 = por %p112, %p113
      %p116 = scmp.ne.s32.totalorder %s99, %s115
      %p117 = scmp.eq.s32.totalorder %s45, 0
      %p118 = por %p116, %p117
      %s119 = sld [smem:[#allocation7 + %s47]]
      %s120 = sld [smem:[#allocation7 + %s54]]
      %s121 = ssub.s32 %s119, %s120
      %p122 = scmp.eq.s32.totalorder %s121, 0
      %s124 = sadd.s32 %s123, 1
      %s125 = scalar_select %p122, %s123, %s124
      %p128 = pneg %p122
      %p129 = scmp.eq.s32.totalorder %s39, 21
      %p130 = por %p128, %p129
      %p131 = scmp.ne.s32.totalorder %s123, %s126
      %p132 = scmp.eq.s32.totalorder %s39, 0
      %p133 = por %p131, %p132
      %p134 = scmp.ne.s32.totalorder %s123, %s126
      %p135 = scmp.eq.s32.totalorder %s44, 21
      %p136 = por %p134, %p135
      %p137 = scmp.ne.s32.totalorder %s126, %s127
      %p138 = scmp.eq.s32.totalorder %s44, 0
      %p139 = por %p137, %p138
      %p140 = scmp.ne.s32.totalorder %s126, %s127
      %p141 = scmp.eq.s32.totalorder %s45, 21
      %p142 = por %p140, %p141
      %p144 = scmp.ne.s32.totalorder %s127, %s143
      %p145 = scmp.eq.s32.totalorder %s45, 0
      %p146 = por %p144, %p145
      %s147 = sld [smem:[#allocation7 + %s47]]
      %s148 = sld [smem:[#allocation7 + %s54]]
      %s149 = ssub.s32 %s147, %s148
      %p150 = scmp.eq.s32.totalorder %s149, 0
      %s152 = sadd.s32 %s151, 1
      %s153 = scalar_select %p150, %s151, %s152
      %p156 = pneg %p150
      %p157 = scmp.eq.s32.totalorder %s39, 21
      %p158 = por %p156, %p157
      %p159 = scmp.ne.s32.totalorder %s151, %s154
      %p160 = scmp.eq.s32.totalorder %s39, 0
      %p161 = por %p159, %p160
      %p162 = scmp.ne.s32.totalorder %s151, %s154
      %p163 = scmp.eq.s32.totalorder %s44, 21
      %p164 = por %p162, %p163
      %p165 = scmp.ne.s32.totalorder %s154, %s155
      %p166 = scmp.eq.s32.totalorder %s44, 0
      %p167 = por %p165, %p166
      %p168 = scmp.ne.s32.totalorder %s154, %s155
      %p169 = scmp.eq.s32.totalorder %s45, 21
      %p170 = por %p168, %p169
      %p172 = scmp.ne.s32.totalorder %s155, %s171
      %p173 = scmp.eq.s32.totalorder %s45, 0
      %p174 = por %p172, %p173
      %s175 = ssub.s32 %s46, %s58
      %p176 = scmp.eq.s32.totalorder %s175, 0
      %s178 = sadd.s32 %s177, 1
      %s179 = scalar_select %p176, %s177, %s178
      %p182 = pneg %p176
      %p183 = scmp.eq.s32.totalorder %s39, 21
      %p184 = por %p182, %p183
      %p185 = scmp.ne.s32.totalorder %s177, %s180
      %p186 = scmp.eq.s32.totalorder %s39, 0
      %p187 = por %p185, %p186
      %p188 = scmp.ne.s32.totalorder %s177, %s180
      %p189 = scmp.eq.s32.totalorder %s44, 21
      %p190 = por %p188, %p189
      %p191 = scmp.ne.s32.totalorder %s180, %s181
      %p192 = scmp.eq.s32.totalorder %s44, 0
      %p193 = por %p191, %p192
      %p194 = scmp.ne.s32.totalorder %s180, %s181
      %p195 = scmp.eq.s32.totalorder %s45, 21
      %p196 = por %p194, %p195
      %p198 = scmp.ne.s32.totalorder %s181, %s197
      %p199 = scmp.eq.s32.totalorder %s45, 0
      %p200 = por %p198, %p199
      %p201 = scmp.le.s32.totalorder 1, %s39
      %p202 = scmp.lt.s32.totalorder %s39, 23
      %p203 = pnand %p201, %p202
      %p204 = pneg %p203
      // Predicated region
      $region9: #{tpu_custom_call.1} parent=5 // pred_check
        _
      $region10: #{tpu_custom_call.1} parent=5 // pred_check_branch
        %206 = sbr.rel (%p203) target = $region12
      $region11: #{tpu_custom_call.1} parent=5 // pred_region
        %s207 = ssub.s32 %s39, 1
      $region12: #{tpu_custom_call.1} parent=5 // pred_fallthru
        _
      %p208 = scmp.lt.s32.totalorder %s39, 22
      // Predicated region
      $region13: #{tpu_custom_call.1} parent=5 // pred_check
        %p209 = pneg %p208
      $region14: #{tpu_custom_call.1} parent=5 // pred_check_branch
        %211 = sbr.rel (%p209) target = $region16
      $region15: #{tpu_custom_call.1} parent=5 // pred_region
        // Predicated region
        $region17: #{tpu_custom_call.1} parent=15 // pred_check
          %p212 = pneg %p75
        $region18: #{tpu_custom_call.1} parent=15 // pred_check_branch
          %214 = sbr.rel (%p212) target = $region20
        $region19: #{tpu_custom_call.1} parent=15 // pred_region
          %s215 = sand.u32 %s65, 1
          %s216 = scalar_lea.sflag [#allocation12], %s215
          %s217 = sand.u32 %s65, 1
          %s218 = smul.addr %s217, 16
          %s219 = scalar_lea.vmem [#allocation11], %s218
          %s220 = sld [smem:[#allocation6 + %s47]]
          %s222 = ssub.s32 256, 256
          %223 = vsyncadd %s216, %s222
          %s224 = smul.addr %s220, 2
          %s225 = smul.addr %s46, 14
          %s226 = sadd.s32 %s224, %s225
          %s227 = smul.addr %s226, 128
          %s228 = scalar_lea.hbm %s5, %s227
          %s229 = sshll.u32 %s219, 4
          %s230 = int_to_ptr.vmem [resolvable:$true] %s229
          %235 = dma.hbm_to_vmem [thread:$0]  %s228, 256, %s230, %s216, 128, 128, 8
        $region20: #{tpu_custom_call.1} parent=15 // pred_fallthru
          _
        // Predicated region
        $region21: #{tpu_custom_call.1} parent=15 // pred_check
          %p236 = pneg %p105
        $region22: #{tpu_custom_call.1} parent=15 // pred_check_branch
          %238 = sbr.rel (%p236) target = $region24
        $region23: #{tpu_custom_call.1} parent=15 // pred_region
          %s239 = sand.u32 %s39, 1
          %s240 = scalar_lea.sflag [#allocation15], %s239
          %s241 = sand.u32 %s95, 1
          %s242 = smul.addr %s241, 16
          %s243 = scalar_lea.vmem [#allocation14], %s242
          %s244 = sld [smem:[#allocation6 + %s47]]
          %s246 = ssub.s32 256, 256
          %247 = vsyncadd %s240, %s246
          %s248 = smul.addr %s244, 2
          %s249 = smul.addr %s46, 14
          %s250 = sadd.s32 %s248, %s249
          %s251 = smul.addr %s250, 128
          %s252 = scalar_lea.hbm %s6, %s251
          %s253 = sshll.u32 %s243, 4
          %s254 = int_to_ptr.vmem [resolvable:$true] %s253
          %259 = dma.hbm_to_vmem [thread:$0]  %s252, 256, %s254, %s240, 128, 128, 8
        $region24: #{tpu_custom_call.1} parent=15 // pred_fallthru
          _
        // Predicated region
        $region25: #{tpu_custom_call.1} parent=15 // pred_check
          %p260 = pneg %p133
        $region26: #{tpu_custom_call.1} parent=15 // pred_check_branch
          %262 = sbr.rel (%p260) target = $region28
        $region27: #{tpu_custom_call.1} parent=15 // pred_region
          %s263 = sand.u32 %s39, 1
          %s264 = scalar_lea.sflag [#allocation15], %s263
          %s265 = sand.u32 %s123, 1
          %s266 = smul.addr %s265, 16
          %s267 = scalar_lea.vmem [#allocation16], %s266
          %s268 = sld [smem:[#allocation7 + %s47]]
          %s270 = ssub.s32 256, 256
          %271 = vsyncadd %s264, %s270
          %s272 = smul.addr %s268, 2
          %s273 = smul.addr %s272, 128
          %s274 = scalar_lea.hbm %s7, %s273
          %s275 = sshll.u32 %s267, 4
          %s276 = int_to_ptr.vmem [resolvable:$true] %s275
          %281 = dma.hbm_to_vmem [thread:$0]  %s274, 256, %s276, %s264, 128, 128, 8
        $region28: #{tpu_custom_call.1} parent=15 // pred_fallthru
          _
        // Predicated region
        $region29: #{tpu_custom_call.1} parent=15 // pred_check
          %p282 = pneg %p161
        $region30: #{tpu_custom_call.1} parent=15 // pred_check_branch
          %284 = sbr.rel (%p282) target = $region32
        $region31: #{tpu_custom_call.1} parent=15 // pred_region
          %s285 = sand.u32 %s151, 1
          %s286 = scalar_lea.sflag [#allocation18], %s285
          %s287 = sand.u32 %s151, 1
          %s288 = smul.addr %s287, 16
          %s289 = scalar_lea.vmem [#allocation17], %s288
          %s290 = sld [smem:[#allocation7 + %s47]]
          %s292 = ssub.s32 256, 256
          %293 = vsyncadd %s286, %s292
          %s294 = smul.addr %s290, 2
          %s295 = smul.addr %s294, 128
          %s296 = scalar_lea.hbm %s8, %s295
          %s297 = sshll.u32 %s289, 4
          %s298 = int_to_ptr.vmem [resolvable:$true] %s297
          %303 = dma.hbm_to_vmem [thread:$0]  %s296, 256, %s298, %s286, 128, 128, 8
        $region32: #{tpu_custom_call.1} parent=15 // pred_fallthru
          _
      $region16: #{tpu_custom_call.1} parent=5 // pred_fallthru
        _
      %p304 = scmp.le.s32.totalorder 1, %s39
      %p305 = scmp.lt.s32.totalorder %s39, 23
      %p306 = pnand %p304, %p305
      %p307 = pneg %p306
      // Predicated region
      $region33: #{tpu_custom_call.1} parent=5 // pred_check
        _
      $region34: #{tpu_custom_call.1} parent=5 // pred_check_branch
        %309 = sbr.rel (%p306) target = $region36
      $region35: #{tpu_custom_call.1} parent=5 // pred_region
        %s310 = ssub.s32 %s39, 1
        %s311 = sand.u32 %s68, 1
        %s312 = scalar_lea.sflag [#allocation12], %s311
        %s313 = sand.u32 %s68, 1
        %s314 = smul.addr %s313, 16
        %s315 = scalar_lea.vmem [#allocation11], %s314
        // Predicated region
        $region37: #{tpu_custom_call.1} parent=35 // pred_check
          %p316 = pneg %p81
        $region38: #{tpu_custom_call.1} parent=35 // pred_check_branch
          %318 = sbr.rel (%p316) target = $region40
        $region39: #{tpu_custom_call.1} parent=35 // pred_region
          %319 = dma.done %s312, 256
        $region40: #{tpu_custom_call.1} parent=35 // pred_fallthru
          _
        %s320 = sand.u32 %s44, 1
        %s321 = scalar_lea.sflag [#allocation15], %s320
        %s322 = sand.u32 %s98, 1
        %s323 = smul.addr %s322, 16
        %s324 = scalar_lea.vmem [#allocation14], %s323
        // Predicated region
        $region41: #{tpu_custom_call.1} parent=35 // pred_check
          %p325 = pneg %p111
        $region42: #{tpu_custom_call.1} parent=35 // pred_check_branch
          %327 = sbr.rel (%p325) target = $region44
        $region43: #{tpu_custom_call.1} parent=35 // pred_region
          %328 = dma.done %s321, 256
        $region44: #{tpu_custom_call.1} parent=35 // pred_fallthru
          _
        %s329 = sand.u32 %s44, 1
        %s330 = scalar_lea.sflag [#allocation15], %s329
        %s331 = sand.u32 %s126, 1
        %s332 = smul.addr %s331, 16
        %s333 = scalar_lea.vmem [#allocation16], %s332
        // Predicated region
        $region45: #{tpu_custom_call.1} parent=35 // pred_check
          %p334 = pneg %p139
        $region46: #{tpu_custom_call.1} parent=35 // pred_check_branch
          %336 = sbr.rel (%p334) target = $region48
        $region47: #{tpu_custom_call.1} parent=35 // pred_region
          %337 = dma.done %s330, 256
        $region48: #{tpu_custom_call.1} parent=35 // pred_fallthru
          _
        %s338 = sand.u32 %s154, 1
        %s339 = scalar_lea.sflag [#allocation18], %s338
        %s340 = sand.u32 %s154, 1
        %s341 = smul.addr %s340, 16
        %s342 = scalar_lea.vmem [#allocation17], %s341
        // Predicated region
        $region49: #{tpu_custom_call.1} parent=35 // pred_check
          %p343 = pneg %p167
        $region50: #{tpu_custom_call.1} parent=35 // pred_check_branch
          %345 = sbr.rel (%p343) target = $region52
        $region51: #{tpu_custom_call.1} parent=35 // pred_region
          %346 = dma.done %s339, 256
        $region52: #{tpu_custom_call.1} parent=35 // pred_fallthru
          _
        %s347 = sand.u32 %s68, 1
        %s348 = scalar_lea.sflag [#allocation12], %s347
        %s349 = sand.u32 %s68, 1
        %s350 = smul.addr %s349, 16
        %s351 = scalar_lea.vmem [#allocation11], %s350
        %p352 = pneg %p81
        %p353 = pneg %p78
        %s354 = sand.u32 %s44, 1
        %s355 = scalar_lea.sflag [#allocation15], %s354
        %s356 = sand.u32 %s98, 1
        %s357 = smul.addr %s356, 16
        %s358 = scalar_lea.vmem [#allocation14], %s357
        %p359 = pneg %p111
        %p360 = pneg %p108
        %s361 = sand.u32 %s44, 1
        %s362 = scalar_lea.sflag [#allocation15], %s361
        %s363 = sand.u32 %s126, 1
        %s364 = smul.addr %s363, 16
        %s365 = scalar_lea.vmem [#allocation16], %s364
        %p366 = pneg %p139
        %p367 = pneg %p136
        %s368 = sand.u32 %s154, 1
        %s369 = scalar_lea.sflag [#allocation18], %s368
        %s370 = sand.u32 %s154, 1
        %s371 = smul.addr %s370, 16
        %s372 = scalar_lea.vmem [#allocation17], %s371
        %p373 = pneg %p167
        %p374 = pneg %p164
        %p375 = pneg %p193
        %p376 = pneg %p190
        %s377 = sand.u32 %s180, 1
        %s378 = scalar_lea.sflag [#allocation13], %s377
        %s379 = sand.u32 %s180, 1
        %s380 = smul.addr %s379, 16
        %s381 = scalar_lea.vmem [#allocation19], %s380
        %s382 = sld [smem:[#allocation6 + %s49]]
        %s383 = sld [smem:[#allocation6 + %s49]]
        %s384 = sld [smem:[#allocation7 + %s49]]
        %s385 = sld [smem:[#allocation7 + %s49]]
        %p386 = scmp.eq.s32.totalorder %s49, 0
        // Predicated region
        $region53: #{tpu_custom_call.1} parent=35 // pred_check
          %p387 = pneg %p386
        $region54: #{tpu_custom_call.1} parent=35 // pred_check_branch
          %389 = sbr.rel (%p387) target = $region56
        $region55: #{tpu_custom_call.1} parent=35 // pred_region
          %vm390 = vcmask 130048
          %391 = vst.msk [vmem:[#allocation2] sm:$0xff] %vm390, 1.0
          %392 = vst.msk [vmem:[#allocation2 + $0x8] sm:$0xff] %vm390, 1.0
          %393 = vst.msk [vmem:[#allocation3] sm:$0xff] %vm390, 1.0
          %394 = vst.msk [vmem:[#allocation3 + $0x8] sm:$0xff] %vm390, 1.0
          %395 = vst.msk [vmem:[#allocation4] sm:$0xff] %vm390, 0.0
          %396 = vst.msk [vmem:[#allocation4 + $0x8] sm:$0xff] %vm390, 0.0
        $region56: #{tpu_custom_call.1} parent=35 // pred_fallthru
          _
        %v397 = vld [vmem:[%s315] sm:$0xff]
        %v398 = vld [vmem:[%s315 + $0x8] sm:$0xff]
        %v399 = vld [vmem:[%s324] sm:$0xff]
        %v400 = vld [vmem:[%s324 + $0x8] sm:$0xff]
        %v401 = vld [vmem:[%s333] sm:$0xff]
        %v402 = vld [vmem:[%s333 + $0x8] sm:$0xff]
        %v403 = vld [vmem:[%s342] sm:$0xff]
        %v404 = vld [vmem:[%s342 + $0x8] sm:$0xff]
        %v405 = vmul.f32 %v397, %v397
        %v406 = vmul.f32 %v398, %v398
        %v407 = vmul.f32 %v399, %v399
        %v408 = vmul.f32 %v400, %v400
        %v409 = vmul.f32 %v397, %v399
        %v410 = vmul.f32 %v398, %v400
        %vm411 = vcmask 130048
        %v413 = vsel %vm411, %v397, 0
        %v416 = vsel %vm411, %v398, 0
        %v419 = vsel %vm411, %v399, 0
        %v422 = vsel %vm411, %v400, 0
        %v425 = vsel %vm411, %v405, 0
        %v428 = vsel %vm411, %v406, 0
        %v431 = vsel %vm411, %v407, 0
        %v434 = vsel %vm411, %v408, 0
        %v437 = vsel %vm411, %v409, 0
        %v440 = vsel %vm411, %v410, 0
        %442 = vmatprep.subr.mxu0 0.0
        %443 = vmatpush1.msra.mxu0 %v403
        %444 = vmatprep.subr.mxu0 0.0
        %445 = vmatpush1.msra.mxu0 %v404
        %446 = vmatprep.subr.mxu0 0.0
        %447 = vmatpush1.msra.mxu0 0.0
        %448 = vmatprep.subr.mxu0 0.0
        %449 = vmatpush1.msra.mxu0 0.0
        %450 = vmatprep.subr.mxu0 0.0
        %451 = vmatpush1.msra.mxu0 0.0
        %452 = vmatprep.subr.mxu0 0.0
        %453 = vmatpush1.msra.mxu0 0.0
        %454 = vmatprep.subr.mxu0 0.0
        %455 = vmatpush1.msra.mxu0 0.0
        %456 = vmatprep.subr.mxu0 0.0
        %457 = vmatpush1.msra.mxu0 0.0
        %458 = vmatprep.subr.mxu0 0.0
        %459 = vmatpush1.msra.mxu0 0.0
        %460 = vmatprep.subr.mxu0 0.0
        %461 = vmatpush1.msra.mxu0 0.0
        %462 = vmatprep.subr.mxu0 0.0
        %463 = vmatpush1.msra.mxu0 0.0
        %464 = vmatprep.subr.mxu0 0.0
        %465 = vmatpush1.msra.mxu0 0.0
        %466 = vmatprep.subr.mxu0 0.0
        %467 = vmatpush1.msra.mxu0 0.0
        %468 = vmatprep.subr.mxu0 0.0
        %469 = vmatpush1.msra.mxu0 0.0
        %470 = vmatprep.subr.mxu0 0.0
        %471 = vmatpush1.msra.mxu0 0.0
        %472 = vmatprep.subr.mxu0 0.0
        %473 = vmatpush1.msra.mxu0 0.0
        %474 = vmatprep.subr.mxu0 0.0
        %475 = vmatpush1.msra.mxu0 0.0
        %476 = vmatprep.subr.mxu0 0.0
        %477 = vmatpush1.msra.mxu0 0.0
        %478 = vmatprep.subr.mxu0 0.0
        %479 = vmatpush1.msra.mxu0 0.0
        %480 = vmatprep.subr.mxu0 0.0
        %481 = vmatpush1.msra.mxu0 0.0
        %482 = vmatprep.subr.mxu0 0.0
        %483 = vmatpush1.msra.mxu0 0.0
        %484 = vmatprep.subr.mxu0 0.0
        %485 = vmatpush1.msra.mxu0 0.0
        %486 = vmatprep.subr.mxu0 0.0
        %487 = vmatpush1.msra.mxu0 0.0
        %488 = vmatprep.subr.mxu0 0.0
        %489 = vmatpush1.msra.mxu0 0.0
        %490 = vmatprep.subr.mxu0 0.0
        %491 = vmatpush1.msra.mxu0 0.0
        %492 = vmatprep.subr.mxu0 0.0
        %493 = vmatpush1.msra.mxu0 0.0
        %494 = vmatprep.subr.mxu0 0.0
        %495 = vmatpush1.msra.mxu0 0.0
        %496 = vmatprep.subr.mxu0 0.0
        %497 = vmatpush1.msra.mxu0 0.0
        %498 = vmatprep.subr.mxu0 0.0
        %499 = vmatpush1.msra.mxu0 0.0
        %500 = vmatprep.subr.mxu0 0.0
        %501 = vmatpush1.msra.mxu0 0.0
        %502 = vmatprep.subr.mxu0 0.0
        %503 = vmatpush1.msra.mxu0 0.0
        %504 = vmatprep.subr.mxu0 0.0
        %505 = vmatpush1.msra.mxu0 0.0
        %506 = vmatprep.mubr.f32.mxu0 0.0
        %507 = vmatmul.mubr.f32.gmra.mrb[0].mxu0 %v413
        %v508 = vpop.f32.mrb[0].mxu0
        %v509 = vadd.f32 0.0, %v508
        %v510 = vpop.f32.mrb[0].mxu0
        %511 = vmatprep.mubr.f32.mxu0 0.0
        %512 = vmatmul.mubr.f32.gmra.mrb[0].mxu0 %v416
        %v513 = vpop.f32.mrb[0].mxu0
        %v514 = vadd.f32 0.0, %v513
        %v515 = vpop.f32.mrb[0].mxu0
        %516 = vmatprep.mubr.f32.mxu0 0.0
        %517 = vmatmul.mubr.f32.gmra.mrb[0].mxu0 %v419
        %v518 = vpop.f32.mrb[0].mxu0
        %v519 = vadd.f32 0.0, %v518
        %v520 = vpop.f32.mrb[0].mxu0
        %521 = vmatprep.mubr.f32.mxu0 0.0
        %522 = vmatmul.mubr.f32.gmra.mrb[0].mxu0 %v422
        %v523 = vpop.f32.mrb[0].mxu0
        %v524 = vadd.f32 0.0, %v523
        %v525 = vpop.f32.mrb[0].mxu0
        %526 = vmatprep.mubr.f32.mxu0 0.0
        %527 = vmatmul.mubr.f32.gmra.mrb[0].mxu0 %v425
        %v528 = vpop.f32.mrb[0].mxu0
        %v529 = vadd.f32 0.0, %v528
        %v530 = vpop.f32.mrb[0].mxu0
        %531 = vmatprep.mubr.f32.mxu0 0.0
        %532 = vmatmul.mubr.f32.gmra.mrb[0].mxu0 %v428
        %v533 = vpop.f32.mrb[0].mxu0
        %v534 = vadd.f32 0.0, %v533
        %v535 = vpop.f32.mrb[0].mxu0
        %536 = vmatprep.mubr.f32.mxu0 0.0
        %537 = vmatmul.mubr.f32.gmra.mrb[0].mxu0 %v431
        %v538 = vpop.f32.mrb[0].mxu0
        %v539 = vadd.f32 0.0, %v538
        %v540 = vpop.f32.mrb[0].mxu0
        %541 = vmatprep.mubr.f32.mxu0 0.0
        %542 = vmatmul.mubr.f32.gmra.mrb[0].mxu0 %v434
        %v543 = vpop.f32.mrb[0].mxu0
        %v544 = vadd.f32 0.0, %v543
        %v545 = vpop.f32.mrb[0].mxu0
        %546 = vmatprep.mubr.f32.mxu0 0.0
        %547 = vmatmul.mubr.f32.gmra.mrb[0].mxu0 %v437
        %v548 = vpop.f32.mrb[0].mxu0
        %v549 = vadd.f32 0.0, %v548
        %v550 = vpop.f32.mrb[0].mxu0
        %551 = vmatprep.mubr.f32.mxu0 0.0
        %552 = vmatmul.mubr.f32.gmra.mrb[0].mxu0 %v440
        %v553 = vpop.f32.mrb[0].mxu0
        %v554 = vadd.f32 0.0, %v553
        %v555 = vpop.f32.mrb[0].mxu0
        %556 = vdwg.mxu0
        %559 = vrot.lane.b32.xlu0 %v519, 16
        %v560 = vpop.permute.xlu0 %559
        %561 = vrot.lane.b32.xlu0 %v524, 16
        %v562 = vpop.permute.xlu0 %561
        %567 = vrot.lane.b32.xlu0 %v529, 32
        %v568 = vpop.permute.xlu0 %567
        %569 = vrot.lane.b32.xlu0 %v534, 32
        %v570 = vpop.permute.xlu0 %569
        %575 = vrot.lane.b32.xlu0 %v539, 48
        %v576 = vpop.permute.xlu0 %575
        %577 = vrot.lane.b32.xlu0 %v544, 48
        %v578 = vpop.permute.xlu0 %577
        %583 = vrot.lane.b32.xlu0 %v549, 64
        %v584 = vpop.permute.xlu0 %583
        %585 = vrot.lane.b32.xlu0 %v554, 64
        %v586 = vpop.permute.xlu0 %585
        %v589 = vsel %vm411, %v509, %v560
        %v590 = vsel %vm411, %v514, %v562
        %vm591 = vcmask 261120
        %v592 = vsel %vm591, %v589, %v568
        %v593 = vsel %vm591, %v590, %v570
        %vm594 = vcmask 392192
        %v595 = vsel %vm594, %v592, %v576
        %v596 = vsel %vm594, %v593, %v578
        %vm597 = vcmask 523264
        %v598 = vsel %vm597, %v595, %v584
        %v599 = vsel %vm597, %v596, %v586
        %v601 = vsel %vm411, %v401, 0
        %v604 = vsel %vm411, %v402, 0
        %606 = vmatprep.subr.mxu0 0.0
        %607 = vmatpush1.msra.mxu0 %v598
        %608 = vmatprep.subr.mxu0 0.0
        %609 = vmatpush1.msra.mxu0 %v599
        %610 = vmatprep.subr.mxu0 0.0
        %611 = vmatpush1.msra.mxu0 0.0
        %612 = vmatprep.subr.mxu0 0.0
        %613 = vmatpush1.msra.mxu0 0.0
        %614 = vmatprep.subr.mxu0 0.0
        %615 = vmatpush1.msra.mxu0 0.0
        %616 = vmatprep.subr.mxu0 0.0
        %617 = vmatpush1.msra.mxu0 0.0
        %618 = vmatprep.subr.mxu0 0.0
        %619 = vmatpush1.msra.mxu0 0.0
        %620 = vmatprep.subr.mxu0 0.0
        %621 = vmatpush1.msra.mxu0 0.0
        %622 = vmatprep.subr.mxu0 0.0
        %623 = vmatpush1.msra.mxu0 0.0
        %624 = vmatprep.subr.mxu0 0.0
        %625 = vmatpush1.msra.mxu0 0.0
        %626 = vmatprep.subr.mxu0 0.0
        %627 = vmatpush1.msra.mxu0 0.0
        %628 = vmatprep.subr.mxu0 0.0
        %629 = vmatpush1.msra.mxu0 0.0
        %630 = vmatprep.subr.mxu0 0.0
        %631 = vmatpush1.msra.mxu0 0.0
        %632 = vmatprep.subr.mxu0 0.0
        %633 = vmatpush1.msra.mxu0 0.0
        %634 = vmatprep.subr.mxu0 0.0
        %635 = vmatpush1.msra.mxu0 0.0
        %636 = vmatprep.subr.mxu0 0.0
        %637 = vmatpush1.msra.mxu0 0.0
        %638 = vmatprep.subr.mxu0 0.0
        %639 = vmatpush1.msra.mxu0 0.0
        %640 = vmatprep.subr.mxu0 0.0
        %641 = vmatpush1.msra.mxu0 0.0
        %642 = vmatprep.subr.mxu0 0.0
        %643 = vmatpush1.msra.mxu0 0.0
        %644 = vmatprep.subr.mxu0 0.0
        %645 = vmatpush1.msra.mxu0 0.0
        %646 = vmatprep.subr.mxu0 0.0
        %647 = vmatpush1.msra.mxu0 0.0
        %648 = vmatprep.subr.mxu0 0.0
        %649 = vmatpush1.msra.mxu0 0.0
        %650 = vmatprep.subr.mxu0 0.0
        %651 = vmatpush1.msra.mxu0 0.0
        %652 = vmatprep.subr.mxu0 0.0
        %653 = vmatpush1.msra.mxu0 0.0
        %654 = vmatprep.subr.mxu0 0.0
        %655 = vmatpush1.msra.mxu0 0.0
        %656 = vmatprep.subr.mxu0 0.0
        %657 = vmatpush1.msra.mxu0 0.0
        %658 = vmatprep.subr.mxu0 0.0
        %659 = vmatpush1.msra.mxu0 0.0
        %660 = vmatprep.subr.mxu0 0.0
        %661 = vmatpush1.msra.mxu0 0.0
        %662 = vmatprep.subr.mxu0 0.0
        %663 = vmatpush1.msra.mxu0 0.0
        %664 = vmatprep.subr.mxu0 0.0
        %665 = vmatpush1.msra.mxu0 0.0
        %666 = vmatprep.subr.mxu0 0.0
        %667 = vmatpush1.msra.mxu0 0.0
        %668 = vmatprep.subr.mxu0 0.0
        %669 = vmatpush1.msra.mxu0 0.0
        %670 = vmatprep.mubr.f32.mxu0 0.0
        %671 = vmatmul.mubr.f32.gmra.mrb[0].mxu0 %v601
        %v672 = vpop.f32.mrb[0].mxu0
        %v673 = vadd.f32 0.0, %v672
        %v674 = vpop.f32.mrb[0].mxu0
        %675 = vmatprep.mubr.f32.mxu0 0.0
        %676 = vmatmul.mubr.f32.gmra.mrb[0].mxu0 %v604
        %v677 = vpop.f32.mrb[0].mxu0
        %v678 = vadd.f32 0.0, %v677
        %v679 = vpop.f32.mrb[0].mxu0
        %680 = vdwg.mxu0
        %v681 = vmul.f32 %v673, %v673
        %v682 = vmul.f32 %v678, %v678
        %685 = vrot.lane.b32.xlu0 %v673, 112
        %v686 = vpop.permute.xlu0 %685
        %687 = vrot.lane.b32.xlu0 %v678, 112
        %v688 = vpop.permute.xlu0 %687
        %v691 = vmul.f32 %v673, %v686
        %v692 = vmul.f32 %v678, %v688
        %695 = vrot.lane.b32.xlu0 %v681, 32
        %v696 = vpop.permute.xlu0 %695
        %697 = vrot.lane.b32.xlu0 %v682, 32
        %v698 = vpop.permute.xlu0 %697
        %v701 = vsub.f32 %v673, %v696
        %v702 = vsub.f32 %v678, %v698
        %705 = vrot.lane.b32.xlu0 %v691, 64
        %v706 = vpop.permute.xlu0 %705
        %707 = vrot.lane.b32.xlu0 %v692, 64
        %v708 = vpop.permute.xlu0 %707
        %v711 = vsub.f32 %v673, %v706
        %v712 = vsub.f32 %v678, %v708
        %v713 = vmul.f32 %v691, 2.0
        %v714 = vmul.f32 %v692, 2.0
        %v715 = vadd.f32 %v713, 0.0001
        %v716 = vadd.f32 %v714, 0.0001
        %717 = vrot.lane.b32.xlu0 %v681, 112
        %v718 = vpop.permute.xlu0 %717
        %719 = vrot.lane.b32.xlu0 %v682, 112
        %v720 = vpop.permute.xlu0 %719
        %v723 = vadd.f32 %v681, %v718
        %v724 = vadd.f32 %v682, %v720
        %v725 = vadd.f32 %v723, 0.0001
        %v726 = vadd.f32 %v724, 0.0001
        %v727 = vrcp.pop %v725
        %v728 = vmul.f32 %v715, %v727
        %v729 = vrcp.pop %v726
        %v730 = vmul.f32 %v716, %v729
        %v731 = vmul.f32 %v711, 2.0
        %v732 = vmul.f32 %v712, 2.0
        %v733 = vadd.f32 %v731, 0.0009
        %v734 = vadd.f32 %v732, 0.0009
        %737 = vrot.lane.b32.xlu0 %v701, 112
        %v738 = vpop.permute.xlu0 %737
        %739 = vrot.lane.b32.xlu0 %v702, 112
        %v740 = vpop.permute.xlu0 %739
        %v743 = vadd.f32 %v701, %v738
        %v744 = vadd.f32 %v702, %v740
        %v745 = vadd.f32 %v743, 0.0009
        %v746 = vadd.f32 %v744, 0.0009
        %749 = vrot.lane.b32.xlu0 %v745, 32
        %v750 = vpop.permute.xlu0 %749
        %751 = vrot.lane.b32.xlu0 %v746, 32
        %v752 = vpop.permute.xlu0 %751
        %v755 = vrcp.pop %v750
        %v756 = vmul.f32 %v733, %v755
        %v757 = vrcp.pop %v752
        %v758 = vmul.f32 %v734, %v757
        %v759 = vld [vmem:[#allocation2] sm:$0xff]
        %v760 = vld [vmem:[#allocation2 + $0x8] sm:$0xff]
        %s761 = sld [smem:[#allocation8 + %s49]]
        %v762 = vmul.f32 %v756, %v756
        %v763 = vmul.f32 %v758, %v758
        %v764 = vmul.f32 %v762, %v762
        %v765 = vmul.f32 %v763, %v763
        %s766 = sand.u32 %s761, 1
        %p767 = scmp.gt.s32.totalorder %s766, 0
        %s768 = scalar_select %p767, 1, 0
        %v769 = vstv %s768
        %vm770 = vcmp.eq.s32.totalorder %v769, 1
        %v771 = vsel %vm770, %v756, 1.0
        %v772 = vsel %vm770, %v758, 1.0
        %s773 = sand.u32 %s761, 2
        %p774 = scmp.gt.s32.totalorder %s773, 0
        %s775 = scalar_select %p774, 1, 0
        %v776 = vstv %s775
        %vm777 = vcmp.eq.s32.totalorder %v776, 1
        %v778 = vsel %vm777, %v762, 1.0
        %v779 = vsel %vm777, %v763, 1.0
        %v780 = vmul.f32 %v771, %v778
        %v781 = vmul.f32 %v772, %v779
        %s782 = sand.u32 %s761, 4
        %p783 = scmp.gt.s32.totalorder %s782, 0
        %s784 = scalar_select %p783, 1, 0
        %v785 = vstv %s784
        %vm786 = vcmp.eq.s32.totalorder %v785, 1
        %v787 = vsel %vm786, %v764, 1.0
        %v788 = vsel %vm786, %v765, 1.0
        %v789 = vmul.f32 %v780, %v787
        %v790 = vmul.f32 %v781, %v788
        %793 = vrot.lane.b32.xlu0 %v789, 64
        %v794 = vpop.permute.xlu0 %793
        %795 = vrot.lane.b32.xlu0 %v790, 64
        %v796 = vpop.permute.xlu0 %795
        %v799 = vmul.f32 %v759, %v794
        %v800 = vmul.f32 %v760, %v796
        %801 = vst.msk [vmem:[#allocation2] sm:$0xff] %vm411, %v799
        %802 = vst.msk [vmem:[#allocation2 + $0x8] sm:$0xff] %vm411, %v800
        %v803 = vld [vmem:[#allocation3] sm:$0xff]
        %v804 = vld [vmem:[#allocation3 + $0x8] sm:$0xff]
        %s805 = sld [smem:[#allocation9 + %s49]]
        %v806 = vmul.f32 %v728, %v728
        %v807 = vmul.f32 %v730, %v730
        %v808 = vmul.f32 %v806, %v806
        %v809 = vmul.f32 %v807, %v807
        %s810 = sand.u32 %s805, 1
        %p811 = scmp.gt.s32.totalorder %s810, 0
        %s812 = scalar_select %p811, 1, 0
        %v813 = vstv %s812
        %vm814 = vcmp.eq.s32.totalorder %v813, 1
        %v815 = vsel %vm814, %v728, 1.0
        %v816 = vsel %vm814, %v730, 1.0
        %s817 = sand.u32 %s805, 2
        %p818 = scmp.gt.s32.totalorder %s817, 0
        %s819 = scalar_select %p818, 1, 0
        %v820 = vstv %s819
        %vm821 = vcmp.eq.s32.totalorder %v820, 1
        %v822 = vsel %vm821, %v806, 1.0
        %v823 = vsel %vm821, %v807, 1.0
        %v824 = vmul.f32 %v815, %v822
        %v825 = vmul.f32 %v816, %v823
        %s826 = sand.u32 %s805, 4
        %p827 = scmp.gt.s32.totalorder %s826, 0
        %s828 = scalar_select %p827, 1, 0
        %v829 = vstv %s828
        %vm830 = vcmp.eq.s32.totalorder %v829, 1
        %v831 = vsel %vm830, %v808, 1.0
        %v832 = vsel %vm830, %v809, 1.0
        %v833 = vmul.f32 %v824, %v831
        %v834 = vmul.f32 %v825, %v832
        %v835 = vmul.f32 %v803, %v833
        %v836 = vmul.f32 %v804, %v834
        %837 = vst.msk [vmem:[#allocation3] sm:$0xff] %vm411, %v835
        %838 = vst.msk [vmem:[#allocation3 + $0x8] sm:$0xff] %vm411, %v836
        %s839 = sld [smem:[#allocation10 + %s49]]
        %s840 = scvt.s32.f32 %s839
        %v841 = vld [vmem:[#allocation4] sm:$0xff]
        %v842 = vld [vmem:[#allocation4 + $0x8] sm:$0xff]
        %v843 = vsub.f32 %v397, %v399
        %v844 = vsub.f32 %v398, %v400
        %v845 = vand.u32 2147483647, %v843
        %v846 = vand.u32 2147483647, %v844
        %v847 = vstv %s840
        %v848 = vmul.f32 %v847, %v845
        %v849 = vmul.f32 %v847, %v846
        %v850 = vadd.f32 %v841, %v848
        %v851 = vadd.f32 %v842, %v849
        %852 = vst.msk [vmem:[#allocation4] sm:$0xff] %vm411, %v850
        %853 = vst.msk [vmem:[#allocation4 + $0x8] sm:$0xff] %vm411, %v851
        %p854 = scmp.eq.s32.totalorder %s49, 10
        // Predicated region
        $region57: #{tpu_custom_call.1} parent=35 // pred_check
          %p855 = pneg %p854
        $region58: #{tpu_custom_call.1} parent=35 // pred_check_branch
          %857 = sbr.rel (%p855) target = $region60
        $region59: #{tpu_custom_call.1} parent=35 // pred_region
          %v858 = vld [vmem:[#allocation4] sm:$0xff]
          %v859 = vld [vmem:[#allocation4 + $0x8] sm:$0xff]
          %v860 = vmul.f32 %v858, 0.14285715
          %v861 = vmul.f32 %v859, 0.14285715
          %v863 = vsel %vm411, %v860, 0
          %v866 = vsel %vm411, %v861, 0
          %868 = vmatprep.subr.mxu0 0.0
          %869 = vmatpush1.msra.mxu0 %v403
          %870 = vmatprep.subr.mxu0 0.0
          %871 = vmatpush1.msra.mxu0 %v404
          %872 = vmatprep.subr.mxu0 0.0
          %873 = vmatpush1.msra.mxu0 0.0
          %874 = vmatprep.subr.mxu0 0.0
          %875 = vmatpush1.msra.mxu0 0.0
          %876 = vmatprep.subr.mxu0 0.0
          %877 = vmatpush1.msra.mxu0 0.0
          %878 = vmatprep.subr.mxu0 0.0
          %879 = vmatpush1.msra.mxu0 0.0
          %880 = vmatprep.subr.mxu0 0.0
          %881 = vmatpush1.msra.mxu0 0.0
          %882 = vmatprep.subr.mxu0 0.0
          %883 = vmatpush1.msra.mxu0 0.0
          %884 = vmatprep.subr.mxu0 0.0
          %885 = vmatpush1.msra.mxu0 0.0
          %886 = vmatprep.subr.mxu0 0.0
          %887 = vmatpush1.msra.mxu0 0.0
          %888 = vmatprep.subr.mxu0 0.0
          %889 = vmatpush1.msra.mxu0 0.0
          %890 = vmatprep.subr.mxu0 0.0
          %891 = vmatpush1.msra.mxu0 0.0
          %892 = vmatprep.subr.mxu0 0.0
          %893 = vmatpush1.msra.mxu0 0.0
          %894 = vmatprep.subr.mxu0 0.0
          %895 = vmatpush1.msra.mxu0 0.0
          %896 = vmatprep.subr.mxu0 0.0
          %897 = vmatpush1.msra.mxu0 0.0
          %898 = vmatprep.subr.mxu0 0.0
          %899 = vmatpush1.msra.mxu0 0.0
          %900 = vmatprep.subr.mxu0 0.0
          %901 = vmatpush1.msra.mxu0 0.0
          %902 = vmatprep.subr.mxu0 0.0
          %903 = vmatpush1.msra.mxu0 0.0
          %904 = vmatprep.subr.mxu0 0.0
          %905 = vmatpush1.msra.mxu0 0.0
          %906 = vmatprep.subr.mxu0 0.0
          %907 = vmatpush1.msra.mxu0 0.0
          %908 = vmatprep.subr.mxu0 0.0
          %909 = vmatpush1.msra.mxu0 0.0
          %910 = vmatprep.subr.mxu0 0.0
          %911 = vmatpush1.msra.mxu0 0.0
          %912 = vmatprep.subr.mxu0 0.0
          %913 = vmatpush1.msra.mxu0 0.0
          %914 = vmatprep.subr.mxu0 0.0
          %915 = vmatpush1.msra.mxu0 0.0
          %916 = vmatprep.subr.mxu0 0.0
          %917 = vmatpush1.msra.mxu0 0.0
          %918 = vmatprep.subr.mxu0 0.0
          %919 = vmatpush1.msra.mxu0 0.0
          %920 = vmatprep.subr.mxu0 0.0
          %921 = vmatpush1.msra.mxu0 0.0
          %922 = vmatprep.subr.mxu0 0.0
          %923 = vmatpush1.msra.mxu0 0.0
          %924 = vmatprep.subr.mxu0 0.0
          %925 = vmatpush1.msra.mxu0 0.0
          %926 = vmatprep.subr.mxu0 0.0
          %927 = vmatpush1.msra.mxu0 0.0
          %928 = vmatprep.subr.mxu0 0.0
          %929 = vmatpush1.msra.mxu0 0.0
          %930 = vmatprep.subr.mxu0 0.0
          %931 = vmatpush1.msra.mxu0 0.0
          %932 = vmatprep.mubr.f32.mxu0 0.0
          %933 = vmatmul.mubr.f32.gmra.mrb[0].mxu0 %v863
          %v934 = vpop.f32.mrb[0].mxu0
          %v935 = vadd.f32 0.0, %v934
          %v936 = vpop.f32.mrb[0].mxu0
          %937 = vmatprep.mubr.f32.mxu0 0.0
          %938 = vmatmul.mubr.f32.gmra.mrb[0].mxu0 %v866
          %v939 = vpop.f32.mrb[0].mxu0
          %v940 = vadd.f32 0.0, %v939
          %v941 = vpop.f32.mrb[0].mxu0
          %942 = vdwg.mxu0
          %943 = vmatprep.subr.mxu0 0.0
          %944 = vmatpush1.msra.mxu0 %v935
          %945 = vmatprep.subr.mxu0 0.0
          %946 = vmatpush1.msra.mxu0 %v940
          %947 = vmatprep.subr.mxu0 0.0
          %948 = vmatpush1.msra.mxu0 0.0
          %949 = vmatprep.subr.mxu0 0.0
          %950 = vmatpush1.msra.mxu0 0.0
          %951 = vmatprep.subr.mxu0 0.0
          %952 = vmatpush1.msra.mxu0 0.0
          %953 = vmatprep.subr.mxu0 0.0
          %954 = vmatpush1.msra.mxu0 0.0
          %955 = vmatprep.subr.mxu0 0.0
          %956 = vmatpush1.msra.mxu0 0.0
          %957 = vmatprep.subr.mxu0 0.0
          %958 = vmatpush1.msra.mxu0 0.0
          %959 = vmatprep.subr.mxu0 0.0
          %960 = vmatpush1.msra.mxu0 0.0
          %961 = vmatprep.subr.mxu0 0.0
          %962 = vmatpush1.msra.mxu0 0.0
          %963 = vmatprep.subr.mxu0 0.0
          %964 = vmatpush1.msra.mxu0 0.0
          %965 = vmatprep.subr.mxu0 0.0
          %966 = vmatpush1.msra.mxu0 0.0
          %967 = vmatprep.subr.mxu0 0.0
          %968 = vmatpush1.msra.mxu0 0.0
          %969 = vmatprep.subr.mxu0 0.0
          %970 = vmatpush1.msra.mxu0 0.0
          %971 = vmatprep.subr.mxu0 0.0
          %972 = vmatpush1.msra.mxu0 0.0
          %973 = vmatprep.subr.mxu0 0.0
          %974 = vmatpush1.msra.mxu0 0.0
          %975 = vmatprep.subr.mxu0 0.0
          %976 = vmatpush1.msra.mxu0 0.0
          %977 = vmatprep.subr.mxu0 0.0
          %978 = vmatpush1.msra.mxu0 0.0
          %979 = vmatprep.subr.mxu0 0.0
          %980 = vmatpush1.msra.mxu0 0.0
          %981 = vmatprep.subr.mxu0 0.0
          %982 = vmatpush1.msra.mxu0 0.0
          %983 = vmatprep.subr.mxu0 0.0
          %984 = vmatpush1.msra.mxu0 0.0
          %985 = vmatprep.subr.mxu0 0.0
          %986 = vmatpush1.msra.mxu0 0.0
          %987 = vmatprep.subr.mxu0 0.0
          %988 = vmatpush1.msra.mxu0 0.0
          %989 = vmatprep.subr.mxu0 0.0
          %990 = vmatpush1.msra.mxu0 0.0
          %991 = vmatprep.subr.mxu0 0.0
          %992 = vmatpush1.msra.mxu0 0.0
          %993 = vmatprep.subr.mxu0 0.0
          %994 = vmatpush1.msra.mxu0 0.0
          %995 = vmatprep.subr.mxu0 0.0
          %996 = vmatpush1.msra.mxu0 0.0
          %997 = vmatprep.subr.mxu0 0.0
          %998 = vmatpush1.msra.mxu0 0.0
          %999 = vmatprep.subr.mxu0 0.0
          %1000 = vmatpush1.msra.mxu0 0.0
          %1001 = vmatprep.subr.mxu0 0.0
          %1002 = vmatpush1.msra.mxu0 0.0
          %1003 = vmatprep.subr.mxu0 0.0
          %1004 = vmatpush1.msra.mxu0 0.0
          %1005 = vmatprep.subr.mxu0 0.0
          %1006 = vmatpush1.msra.mxu0 0.0
          %1007 = vmatprep.mubr.f32.mxu0 0.0
          %1008 = vmatmul.mubr.f32.gmra.mrb[0].mxu0 %v601
          %v1009 = vpop.f32.mrb[0].mxu0
          %v1010 = vadd.f32 0.0, %v1009
          %v1011 = vpop.f32.mrb[0].mxu0
          %1012 = vmatprep.mubr.f32.mxu0 0.0
          %1013 = vmatmul.mubr.f32.gmra.mrb[0].mxu0 %v604
          %v1014 = vpop.f32.mrb[0].mxu0
          %v1015 = vadd.f32 0.0, %v1014
          %v1016 = vpop.f32.mrb[0].mxu0
          %1017 = vdwg.mxu0
          %v1018 = vld [vmem:[#allocation3] sm:$0xff]
          %v1019 = vld [vmem:[#allocation3 + $0x8] sm:$0xff]
          %v1020 = vld [vmem:[#allocation2] sm:$0xff]
          %v1021 = vld [vmem:[#allocation2 + $0x8] sm:$0xff]
          %v1022 = vmul.f32 %v1018, %v1020
          %v1023 = vmul.f32 %v1019, %v1021
          %v1024 = vsub.f32 1.0, %v1022
          %v1025 = vsub.f32 1.0, %v1023
          %v1026 = vmul.f32 %v1024, 0.84
          %v1027 = vmul.f32 %v1025, 0.84
          %v1028 = vmul.f32 %v1010, 0.16
          %v1029 = vmul.f32 %v1015, 0.16
          %v1030 = vadd.f32 %v1026, %v1028
          %v1031 = vadd.f32 %v1027, %v1029
          %v1032 = vmul.f32 %v1030, 200.0
          %v1033 = vmul.f32 %v1031, 200.0
          %1034 = vst.msk [vmem:[%s381] sm:$0xff] %vm411, %v1032
          %1035 = vst.msk [vmem:[%s381 + $0x8] sm:$0xff] %vm411, %v1033
        $region60: #{tpu_custom_call.1} parent=35 // pred_fallthru
          _
        %s1036 = sand.u32 %s180, 1
        %s1037 = scalar_lea.sflag [#allocation13], %s1036
        %s1038 = sand.u32 %s180, 1
        %s1039 = smul.addr %s1038, 16
        %s1040 = scalar_lea.vmem [#allocation19], %s1039
        // Predicated region
        $region61: #{tpu_custom_call.1} parent=35 // pred_check
          %p1041 = pneg %p190
        $region62: #{tpu_custom_call.1} parent=35 // pred_check_branch
          %1043 = sbr.rel (%p1041) target = $region64
        $region63: #{tpu_custom_call.1} parent=35 // pred_region
          %s1045 = ssub.s32 256, 256
          %1046 = vsyncadd %s1037, %s1045
          %s1047 = smul.addr %s48, 2
          %s1048 = smul.addr %s1047, 128
          %s1049 = scalar_lea.hbm %s9, %s1048
          %s1050 = sshll.u32 %s1040, 4
          %s1051 = int_to_ptr.vmem [resolvable:$true] %s1050
          %1056 = dma.vmem_to_hbm [thread:$0]  %s1051, 256, %s1049, %s1037, 128, 128, 8
        $region64: #{tpu_custom_call.1} parent=35 // pred_fallthru
          _
      $region36: #{tpu_custom_call.1} parent=5 // pred_fallthru
        _
      %p1057 = scmp.le.s32.totalorder 2, %s39
      // Predicated region
      $region65: #{tpu_custom_call.1} parent=5 // pred_check
        %p1058 = pneg %p1057
      $region66: #{tpu_custom_call.1} parent=5 // pred_check_branch
        %1060 = sbr.rel (%p1058) target = $region68
      $region67: #{tpu_custom_call.1} parent=5 // pred_region
        %s1061 = ssub.s32 %s39, 2
        // Predicated region
        $region69: #{tpu_custom_call.1} parent=67 // pred_check
          %p1062 = pneg %p196
        $region70: #{tpu_custom_call.1} parent=67 // pred_check_branch
          %1064 = sbr.rel (%p1062) target = $region72
        $region71: #{tpu_custom_call.1} parent=67 // pred_region
          %s1065 = sand.u32 %s181, 1
          %s1066 = scalar_lea.sflag [#allocation13], %s1065
          %s1067 = sand.u32 %s181, 1
          %s1068 = smul.addr %s1067, 16
          %s1069 = scalar_lea.vmem [#allocation19], %s1068
          %1070 = dma.done %s1066, 256
        $region72: #{tpu_custom_call.1} parent=67 // pred_fallthru
          _
      $region68: #{tpu_custom_call.1} parent=5 // pred_fallthru
        _
    $region6: #{tpu_custom_call.1} parent=1 // loop_footer
      %s43 = sadd.s32 1, %s39
    $region7: #{tpu_custom_call.1} parent=1 // loop_footer_branch
      %38 = sbr.rel target = $region3
    $region8: #{tpu_custom_call.1} parent=1 // loop_exit
      _
    %1071 = vsyncpa [#allocation12], 1
    %s1072 = scalar_lea.sflag [#allocation12], 1
    %1073 = vsyncpa %s1072, 1
    %1074 = vsyncpa [#allocation15], 1
    %s1075 = scalar_lea.sflag [#allocation15], 1
    %1076 = vsyncpa %s1075, 1
    %1077 = vsyncpa [#allocation18], 1
    %s1078 = scalar_lea.sflag [#allocation18], 1
    %1079 = vsyncpa %s1078, 1
    %1080 = vsyncpa [#allocation13], 1
    %s1081 = scalar_lea.sflag [#allocation13], 1
    %1082 = vsyncpa %s1081, 1

</llo_original>
